<compile_context>
chip_gen: v7x
topology: tpu7x:2x2x1
jax: 0.10.0
libtpu: 0.0.40
codegen_flags: <defaults>
</compile_context>

<pallas_src>
import functools
import math

import jax
import jax.numpy as jnp
from jax import lax
from jax.experimental import pallas as pl
from jax.experimental.pallas import tpu as pltpu

# Full-f32 matmul precision everywhere (kernel MXU dots and the reference)
# so the Pallas result and the pure-JAX reference agree to ~1e-6.
jax.config.update("jax_default_matmul_precision", "highest")
_PREC = lax.Precision.HIGHEST

_VMEM_LIMIT = 32 * 1024 * 1024  # safe on v5e/v6e (128 MiB phys) and v7x (64 MiB phys)


def _pick_tile(dim, target):
    """Largest tile <= target that divides dim (full dim if it already fits)."""
    if dim <= target:
        return dim
    for t in (target, target // 2, target // 4, target // 8):
        if t >= 128 and dim % t == 0:
            return t
    return dim  # fallback: take the whole dimension


# ----------------------------------------------------------------------------
# Kernel 1: LayerNorm (row-tiled)
# ----------------------------------------------------------------------------
def _layernorm_kernel(x_ref, w_ref, b_ref, o_ref, *, eps):
    x = x_ref[...].astype(jnp.float32)
    mean = jnp.mean(x, axis=-1, keepdims=True)
    xc = x - mean
    var = jnp.mean(xc * xc, axis=-1, keepdims=True)
    inv = 1.0 / jnp.sqrt(var + eps)
    y = xc * inv * w_ref[...].astype(jnp.float32) + b_ref[...].astype(jnp.float32)
    o_ref[...] = y.astype(o_ref.dtype)


def pallas_layernorm(x, w, b, *, eps=1e-5, tm_target=512):
    M, C = x.shape
    tm = _pick_tile(M, tm_target)
    return pl.pallas_call(
        functools.partial(_layernorm_kernel, eps=eps),
        out_shape=jax.ShapeDtypeStruct((M, C), x.dtype),
        grid=(M // tm,),
        in_specs=[
            pl.BlockSpec((tm, C), lambda i: (i, 0)),
            pl.BlockSpec((1, C), lambda i: (0, 0)),
            pl.BlockSpec((1, C), lambda i: (0, 0)),
        ],
        out_specs=pl.BlockSpec((tm, C), lambda i: (i, 0)),
        compiler_params=pltpu.CompilerParams(
            dimension_semantics=("parallel",),
            vmem_limit_bytes=_VMEM_LIMIT),
    )(x, w.reshape(1, C), b.reshape(1, C))


# ----------------------------------------------------------------------------
# Kernel 2: tiled matmul + bias (+ optional fused tanh-GELU and residual add)
# ----------------------------------------------------------------------------
def _linear_kernel(x_ref, w_ref, b_ref, *rest, activation):
    if len(rest) == 3:
        r_ref, o_ref, acc_ref = rest
    else:
        r_ref = None
        o_ref, acc_ref = rest

    k = pl.program_id(2)

    @pl.when(k == 0)
    def _init():
        acc_ref[...] = jnp.zeros_like(acc_ref)

    acc_ref[...] += jnp.dot(x_ref[...], w_ref[...],
                            preferred_element_type=jnp.float32,
                            precision=_PREC)

    @pl.when(k == pl.num_programs(2) - 1)
    def _finalize():
        out = acc_ref[...] + b_ref[...].astype(jnp.float32)
        if activation == "gelu_tanh":
            c = 0.7978845608028654  # sqrt(2/pi)
            out = 0.5 * out * (1.0 + jnp.tanh(c * (out + 0.044715 * out * out * out)))
        if r_ref is not None:
            out = out + r_ref[...].astype(jnp.float32)
        o_ref[...] = out.astype(o_ref.dtype)


def pallas_linear(x, w, b, *, residual=None, activation=None,
                  tm_target=256, tn_target=256, tk_target=512):
    M, K = x.shape
    K2, N = w.shape
    assert K == K2
    tm = _pick_tile(M, tm_target)
    tn = _pick_tile(N, tn_target)
    tk = _pick_tile(K, tk_target)

    in_specs = [
        pl.BlockSpec((tm, tk), lambda i, j, k: (i, k)),
        pl.BlockSpec((tk, tn), lambda i, j, k: (k, j)),
        pl.BlockSpec((1, tn), lambda i, j, k: (0, j)),
    ]
    args = [x, w, b.reshape(1, N)]
    if residual is not None:
        in_specs.append(pl.BlockSpec((tm, tn), lambda i, j, k: (i, j)))
        args.append(residual)

    return pl.pallas_call(
        functools.partial(_linear_kernel, activation=activation),
        out_shape=jax.ShapeDtypeStruct((M, N), x.dtype),
        grid=(M // tm, N // tn, K // tk),
        in_specs=in_specs,
        out_specs=pl.BlockSpec((tm, tn), lambda i, j, k: (i, j)),
        scratch_shapes=[pltpu.VMEM((tm, tn), jnp.float32)],
        compiler_params=pltpu.CompilerParams(
            dimension_semantics=("parallel", "parallel", "arbitrary"),
            vmem_limit_bytes=_VMEM_LIMIT),
    )(*args)


# ----------------------------------------------------------------------------
# Kernel 3: flash-style causal attention, all heads per program, (B, T, C) layout
# ----------------------------------------------------------------------------
def _flash_attn_kernel(q_ref, k_ref, v_ref, o_ref, m_scr, l_scr, acc_scr,
                       *, n_head, tq, tk, scale):
    qi = pl.program_id(1)
    ki = pl.program_id(2)
    nk = pl.num_programs(2)
    D = q_ref.shape[-1] // n_head

    @pl.when(ki == 0)
    def _init():
        m_scr[...] = jnp.full_like(m_scr, -jnp.inf)
        l_scr[...] = jnp.zeros_like(l_scr)
        acc_scr[...] = jnp.zeros_like(acc_scr)

    # Skip KV tiles that lie entirely in the causal future of this Q tile.
    @pl.when(ki * tk <= qi * tq + (tq - 1))
    def _compute():
        q = q_ref[0]    # (tq, C)
        k = k_ref[0]    # (tk, C)
        v = v_ref[0]    # (tk, C)
        q_idx = qi * tq + lax.broadcasted_iota(jnp.int32, (tq, tk), 0)
        k_idx = ki * tk + lax.broadcasted_iota(jnp.int32, (tq, tk), 1)
        causal = k_idx <= q_idx
        for h in range(n_head):
            sl = slice(h * D, (h + 1) * D)
            qh = q[:, sl].astype(jnp.float32) * scale   # fold 1/sqrt(D) into q
            kh = k[:, sl]
            vh = v[:, sl]
            # QK^T without an explicit transpose: contract last dims directly.
            s = lax.dot_general(qh, kh, (((1,), (1,)), ((), ())),
                                preferred_element_type=jnp.float32,
                                precision=_PREC)
            s = jnp.where(causal, s, -jnp.inf)
            m_prev = m_scr[h]                            # (tq, 1)
            l_prev = l_scr[h]
            m_new = jnp.maximum(m_prev, jnp.max(s, axis=-1, keepdims=True))
            alpha = jnp.exp(m_prev - m_new)
            p = jnp.exp(s - m_new)
            l_scr[h] = alpha * l_prev + jnp.sum(p, axis=-1, keepdims=True)
            acc_scr[:, sl] = alpha * acc_scr[:, sl] + jnp.dot(
                p, vh.astype(jnp.float32),
                preferred_element_type=jnp.float32, precision=_PREC)
            m_scr[h] = m_new

    @pl.when(ki == nk - 1)
    def _finalize():
        for h in range(n_head):
            sl = slice(h * D, (h + 1) * D)
            # Exact divide (once per output tile) -> matches the reference softmax.
            acc_scr[:, sl] = acc_scr[:, sl] / l_scr[h]
        # single lane-dense (tq, C) store to HBM
        o_ref[0] = acc_scr[...].astype(o_ref.dtype)


def pallas_causal_attention(q, k, v, n_head, *, tq_target=128, tk_target=128):
    # q, k, v: (B, T, C) with heads packed along C — no head transposes needed.
    B, T, C = q.shape
    assert C % n_head == 0
    tq = _pick_tile(T, tq_target)
    tk = _pick_tile(T, tk_target)
    scale = 1.0 / math.sqrt(C // n_head)

    q_spec = pl.BlockSpec((1, tq, C), lambda b, qi, ki: (b, qi, 0))
    kv_spec = pl.BlockSpec((1, tk, C), lambda b, qi, ki: (b, ki, 0))
    return pl.pallas_call(
        functools.partial(_flash_attn_kernel, n_head=n_head, tq=tq, tk=tk, scale=scale),
        out_shape=jax.ShapeDtypeStruct((B, T, C), q.dtype),
        grid=(B, T // tq, T // tk),
        in_specs=[q_spec, kv_spec, kv_spec],
        out_specs=pl.BlockSpec((1, tq, C), lambda b, qi, ki: (b, qi, 0)),
        scratch_shapes=[
            pltpu.VMEM((n_head, tq, 1), jnp.float32),   # running max m
            pltpu.VMEM((n_head, tq, 1), jnp.float32),   # running denom l
            pltpu.VMEM((tq, C), jnp.float32),           # running output accumulator
        ],
        compiler_params=pltpu.CompilerParams(
            dimension_semantics=("parallel", "parallel", "arbitrary"),
            vmem_limit_bytes=_VMEM_LIMIT),
    )(q, k, v)


# ----------------------------------------------------------------------------
# Full Block forward (glue in plain JAX, hot paths in Pallas)
# ----------------------------------------------------------------------------
def gpt2_block_forward(x, params, n_head):
    B, T, C = x.shape
    M = B * T
    x2 = x.reshape(M, C)

    # Attention branch: ln_1 -> c_attn -> flash attention -> c_proj (+ fused residual)
    h = pallas_layernorm(x2, params["ln1_w"], params["ln1_b"])
    qkv = pallas_linear(h, params["c_attn_w"], params["c_attn_b"]).reshape(B, T, 3 * C)
    q, k, v = jnp.split(qkv, 3, axis=-1)                      # (B, T, C) each
    y = pallas_causal_attention(q, k, v, n_head)              # (B, T, C)
    x2 = pallas_linear(y.reshape(M, C), params["c_proj_w"], params["c_proj_b"],
                       residual=x2)

    # MLP branch: ln_2 -> c_fc (+ fused tanh-GELU) -> c_proj (+ fused residual)
    h = pallas_layernorm(x2, params["ln2_w"], params["ln2_b"])
    h = pallas_linear(h, params["c_fc_w"], params["c_fc_b"], activation="gelu_tanh")
    x2 = pallas_linear(h, params["mlp_cproj_w"], params["mlp_cproj_b"], residual=x2)
    return x2.reshape(B, T, C)


# ----------------------------------------------------------------------------
# Pure-JAX reference (matches the PyTorch Block semantics)
# ----------------------------------------------------------------------------
def reference_block(x, params, n_head, eps=1e-5):
    def ln(z, w, b):
        m = z.mean(-1, keepdims=True)
        v = ((z - m) ** 2).mean(-1, keepdims=True)
        return (z - m) / jnp.sqrt(v + eps) * w + b

    B, T, C = x.shape
    D = C // n_head
    h = ln(x, params["ln1_w"], params["ln1_b"])
    qkv = jnp.einsum("btc,cn->btn", h, params["c_attn_w"], precision=_PREC) \
        + params["c_attn_b"]
    q, k, v = jnp.split(qkv, 3, axis=-1)
    q = q.reshape(B, T, n_head, D).transpose(0, 2, 1, 3)
    k = k.reshape(B, T, n_head, D).transpose(0, 2, 1, 3)
    v = v.reshape(B, T, n_head, D).transpose(0, 2, 1, 3)
    s = jnp.einsum("bhqd,bhkd->bhqk", q, k, precision=_PREC) / math.sqrt(D)
    mask = jnp.tril(jnp.ones((T, T), dtype=bool))
    s = jnp.where(mask, s, -jnp.inf)
    p = jax.nn.softmax(s, axis=-1)
    y = jnp.einsum("bhqk,bhkd->bhqd", p, v, precision=_PREC)
    y = y.transpose(0, 2, 1, 3).reshape(B, T, C)
    x = x + jnp.einsum("btc,cn->btn", y, params["c_proj_w"], precision=_PREC) \
        + params["c_proj_b"]

    h = ln(x, params["ln2_w"], params["ln2_b"])
    h = jnp.einsum("btc,cn->btn", h, params["c_fc_w"], precision=_PREC) \
        + params["c_fc_b"]
    h = 0.5 * h * (1.0 + jnp.tanh(math.sqrt(2.0 / math.pi) * (h + 0.044715 * h ** 3)))
    x = x + jnp.einsum("btn,nc->btc", h, params["mlp_cproj_w"], precision=_PREC) \
        + params["mlp_cproj_b"]
    return x


if __name__ == "__main__":
    # Small config consistent with the module: n_embed=32, n_head=4, block_size=8
    B, T, C, n_head = 2, 8, 32, 4

    key = jax.random.PRNGKey(0)
    keys = jax.random.split(key, 11)
    x = jax.random.normal(keys[0], (B, T, C), dtype=jnp.float32)

    f32 = jnp.float32
    params = {
        "ln1_w": jnp.ones((C,), f32) + 0.1 * jax.random.normal(keys[1], (C,), f32),
        "ln1_b": 0.1 * jax.random.normal(keys[2], (C,), f32),
        "c_attn_w": 0.2 * jax.random.normal(keys[3], (C, 3 * C), f32),
        "c_attn_b": 0.1 * jax.random.normal(keys[4], (3 * C,), f32),
        "c_proj_w": 0.2 * jax.random.normal(keys[5], (C, C), f32),
        "c_proj_b": 0.1 * jax.random.normal(keys[6], (C,), f32),
        "ln2_w": jnp.ones((C,), f32) + 0.1 * jax.random.normal(keys[7], (C,), f32),
        "ln2_b": 0.1 * jax.random.normal(keys[8], (C,), f32),
        "c_fc_w": 0.2 * jax.random.normal(keys[9], (C, 4 * C), f32),
        "c_fc_b": jnp.zeros((4 * C,), f32),
        "mlp_cproj_w": 0.2 * jax.random.normal(keys[10], (4 * C, C), f32),
        "mlp_cproj_b": jnp.zeros((C,), f32),
    }

    y = jax.block_until_ready(gpt2_block_forward(x, params, n_head))
    y_ref = reference_block(x, params, n_head)

    assert y.shape == (B, T, C)
    max_err = float(jnp.max(jnp.abs(y - y_ref)))
    assert jnp.allclose(y, y_ref, atol=1e-3, rtol=1e-3), f"mismatch vs reference: {max_err}"

    print("KERNEL_OK")
</pallas_src>

<mosaic_0001>
module attributes {stable_mosaic.version = 11 : i64} {
  func.func @_layernorm_kernel(%arg0: i32, %arg1: memref<16x32xf32, #tpu.memory_space<vmem>>, %arg2: memref<1x32xf32, #tpu.memory_space<vmem>>, %arg3: memref<1x32xf32, #tpu.memory_space<vmem>>, %arg4: memref<16x32xf32, #tpu.memory_space<vmem>>) attributes {dimension_semantics = [#tpu.dimension_semantics<parallel>], iteration_bounds = array<i64: 1>, scalar_prefetch = 0 : i64, scratch_operands = 0 : i64, tpu.core_type = #tpu.core_type<tc>, window_params = [{transform_indices = @transform_0, window_bounds = array<i64: 16, 32>}, {pipeline_mode = #tpu.pipeline_mode<synchronous>, transform_indices = @transform_1, window_bounds = array<i64: 1, 32>}, {pipeline_mode = #tpu.pipeline_mode<synchronous>, transform_indices = @transform_2, window_bounds = array<i64: 1, 32>}, {transform_indices = @transform_3, window_bounds = array<i64: 16, 32>}]} {
    %c0 = arith.constant 0 : index
    %c0_0 = arith.constant 0 : index
    %0 = vector.load %arg1[%c0, %c0_0] : memref<16x32xf32, #tpu.memory_space<vmem>>, vector<16x32xf32>
    %cst = arith.constant dense<0.000000e+00> : vector<16xf32>
    %1 = vector.multi_reduction <add>, %0, %cst [1] : vector<16x32xf32> to vector<16xf32>
    %2 = vector.shape_cast %1 : vector<16xf32> to vector<16x1xf32>
    %cst_1 = arith.constant 3.200000e+01 : f32
    %3 = vector.broadcast %cst_1 : f32 to vector<16x1xf32>
    %4 = arith.divf %2, %3 : vector<16x1xf32>
    %5 = vector.broadcast %4 : vector<16x1xf32> to vector<16x32xf32>
    %6 = arith.subf %0, %5 : vector<16x32xf32>
    %7 = arith.mulf %6, %6 : vector<16x32xf32>
    %cst_2 = arith.constant dense<0.000000e+00> : vector<16xf32>
    %8 = vector.multi_reduction <add>, %7, %cst_2 [1] : vector<16x32xf32> to vector<16xf32>
    %9 = vector.shape_cast %8 : vector<16xf32> to vector<16x1xf32>
    %cst_3 = arith.constant 3.200000e+01 : f32
    %10 = vector.broadcast %cst_3 : f32 to vector<16x1xf32>
    %11 = arith.divf %9, %10 : vector<16x1xf32>
    %cst_4 = arith.constant 9.99999974E-6 : f32
    %12 = vector.broadcast %cst_4 : f32 to vector<16x1xf32>
    %13 = arith.addf %11, %12 : vector<16x1xf32>
    %14 = math.sqrt %13 : vector<16x1xf32>
    %cst_5 = arith.constant 1.000000e+00 : f32
    %15 = vector.broadcast %cst_5 : f32 to vector<16x1xf32>
    %16 = arith.divf %15, %14 : vector<16x1xf32>
    %17 = vector.broadcast %16 : vector<16x1xf32> to vector<16x32xf32>
    %18 = arith.mulf %6, %17 : vector<16x32xf32>
    %c0_6 = arith.constant 0 : index
    %c0_7 = arith.constant 0 : index
    %19 = vector.load %arg2[%c0_6, %c0_7] : memref<1x32xf32, #tpu.memory_space<vmem>>, vector<1x32xf32>
    %20 = vector.broadcast %19 : vector<1x32xf32> to vector<16x32xf32>
    %21 = arith.mulf %18, %20 : vector<16x32xf32>
    %c0_8 = arith.constant 0 : index
    %c0_9 = arith.constant 0 : index
    %22 = vector.load %arg3[%c0_8, %c0_9] : memref<1x32xf32, #tpu.memory_space<vmem>>, vector<1x32xf32>
    %23 = vector.broadcast %22 : vector<1x32xf32> to vector<16x32xf32>
    %24 = arith.addf %21, %23 : vector<16x32xf32>
    %c0_10 = arith.constant 0 : index
    %c0_11 = arith.constant 0 : index
    %25 = vector.load %arg4[%c0_10, %c0_11] : memref<16x32xf32, #tpu.memory_space<vmem>>, vector<16x32xf32>
    tpu.vector_store %arg4[%c0_10, %c0_11], %24 {strides = array<i32>} : memref<16x32xf32, #tpu.memory_space<vmem>>, vector<16x32xf32>,
    return
  }
  func.func @transform_0(%arg0: i32) -> (i32, i32) {
    %c0_i32 = arith.constant 0 : i32
    %c0_i32_0 = arith.constant 0 : i32
    return %arg0, %c0_i32 : i32, i32
  }
  func.func @transform_1(%arg0: i32) -> (i32, i32) {
    %c0_i32 = arith.constant 0 : i32
    %c0_i32_0 = arith.constant 0 : i32
    %c0_i32_1 = arith.constant 0 : i32
    return %c0_i32, %c0_i32_0 : i32, i32
  }
  func.func @transform_2(%arg0: i32) -> (i32, i32) {
    %c0_i32 = arith.constant 0 : i32
    %c0_i32_0 = arith.constant 0 : i32
    %c0_i32_1 = arith.constant 0 : i32
    return %c0_i32, %c0_i32_0 : i32, i32
  }
  func.func @transform_3(%arg0: i32) -> (i32, i32) {
    %c0_i32 = arith.constant 0 : i32
    %c0_i32_0 = arith.constant 0 : i32
    return %arg0, %c0_i32 : i32, i32
  }
}

</mosaic_0001>

<llo_original>
// kernel: tpu_custom_call.1
$region0: #{tpu_custom_call.1}
  #allocation0 [shape = 'u32[]', space=smem, size = 0x4, offset = 0x4, fixed_abs, tag = 'smem constant byte address 0x4 - core index']
  #allocation1 [shape = 'u32[144,128]{1,0:T(1,128)}', space=vmem, size = 0x12000, scoped, tag = 'internal scratch']
  %s0 = inlined_call_operand.hbm [shape: f32[16,32], index: 0, kind: input, shape index: {}]
  %s1 = inlined_call_operand.vmem [shape: f32[1,32], index: 1, kind: input, shape index: {}]
  %s2 = inlined_call_operand.vmem [shape: f32[1,32], index: 2, kind: input, shape index: {}]
  %s3 = inlined_call_operand.hbm [shape: f32[16,32], index: 3, kind: output, shape index: {}]
  %s4 = sld [smem:[#allocation0]]
  $region26: #{tpu_custom_call.1} parent=0
    _
  %s6 = ssub.s32 1, %s4
  %s7 = scalar_select 0, %s6, %s4
  $region1: #{tpu_custom_call.1} parent=0
    #allocation2 [shape = 'u8[8192]{0}', space=vmem, size = 0x2000, scoped, tag = 'input window, operand 0, single buffered']
    #allocation3 [shape = 's32[1]{0}', space=sflag, size = 0x4, scoped, tag = 'scoped memory for tpu_custom_call.1']
    #allocation4 [shape = 's32[1]{0}', space=sflag, size = 0x4, scoped, tag = 'scoped memory for tpu_custom_call.1']
    #allocation5 [shape = 'u8[8192]{0}', space=vmem, size = 0x2000, scoped, tag = 'output window, operand 0, single buffered']
    %8 = vsyncpa [#allocation3], 0
    %9 = vsyncpa [#allocation4], 0
    // Predicated region
    $region2: #{tpu_custom_call.1} parent=1 // pred_check
      _
    $region3: #{tpu_custom_call.1} parent=1 // pred_check_branch
      %11 = sbr.rel (0) target = $region5
    $region4: #{tpu_custom_call.1} parent=1 // pred_region
      %s13 = ssub.s32 256, 256
      %14 = vsyncadd [#allocation3], %s13
      %s15 = sshll.u32 [#allocation2], 4
      %s16 = int_to_ptr.vmem [resolvable:$true] %s15
      %21 = dma.hbm_to_vmem [thread:$0]  %s0, 256, %s16, [#allocation3], 128, 128, 8
    $region5: #{tpu_custom_call.1} parent=1 // pred_fallthru
      _
    // Predicated region
    $region6: #{tpu_custom_call.1} parent=1 // pred_check
      _
    $region7: #{tpu_custom_call.1} parent=1 // pred_check_branch
      %23 = sbr.rel (0) target = $region9
    $region8: #{tpu_custom_call.1} parent=1 // pred_region
      _
    $region9: #{tpu_custom_call.1} parent=1 // pred_fallthru
      _
    // Predicated region
    $region10: #{tpu_custom_call.1} parent=1 // pred_check
      _
    $region11: #{tpu_custom_call.1} parent=1 // pred_check_branch
      %25 = sbr.rel (0) target = $region13
    $region12: #{tpu_custom_call.1} parent=1 // pred_region
      _
    $region13: #{tpu_custom_call.1} parent=1 // pred_fallthru
      _
    // Predicated region
    $region14: #{tpu_custom_call.1} parent=1 // pred_check
      _
    $region15: #{tpu_custom_call.1} parent=1 // pred_check_branch
      %27 = sbr.rel (0) target = $region17
    $region16: #{tpu_custom_call.1} parent=1 // pred_region
      %28 = dma.done [#allocation3], 256
    $region17: #{tpu_custom_call.1} parent=1 // pred_fallthru
      _
    %v29 = vld [vmem:[#allocation2] sm:$0xff]
    %v30 = vld [vmem:[#allocation2 + $0x8] sm:$0xff]
    %vm31 = vcmask 261120
    %v32 = vsel %vm31, %v29, 0.0
    %33 = vadd.xlane.f32.xlu0 %v32
    %v34 = vpop.xlane.xlu0 %33
    %v35 = vsel %vm31, %v30, 0.0
    %36 = vadd.xlane.f32.xlu0 %v35
    %v37 = vpop.xlane.xlu0 %36
    %v38 = vrcp.pop 32.0
    %v39 = vmul.f32 %v34, %v38
    %v40 = vmul.f32 %v37, %v38
    %v41 = vsub.f32 %v29, %v39
    %v42 = vsub.f32 %v30, %v40
    %v43 = vmul.f32 %v41, %v41
    %v44 = vmul.f32 %v42, %v42
    %v45 = vsel %vm31, %v43, 0.0
    %46 = vadd.xlane.f32.xlu0 %v45
    %v47 = vpop.xlane.xlu0 %46
    %v48 = vsel %vm31, %v44, 0.0
    %49 = vadd.xlane.f32.xlu0 %v48
    %v50 = vpop.xlane.xlu0 %49
    %v51 = vmul.f32 %v47, %v38
    %v52 = vmul.f32 %v50, %v38
    %v53 = vadd.f32 %v51, 1e-05
    %v54 = vadd.f32 %v52, 1e-05
    %v55 = vrsqrt.pop %v53
    %v56 = vmul.f32 %v53, %v55
    %vm57 = vcmp.eq.f32.partialorder %v53, inf
    %v58 = vsel %vm57, %v53, %v56
    %vm59 = vcmp.eq.f32.partialorder %v53, 0.0
    %v60 = vand.u32 %v53, 2147483648
    %v61 = vsel %vm59, %v60, %v58
    %v62 = vrsqrt.pop %v54
    %v63 = vmul.f32 %v54, %v62
    %vm64 = vcmp.eq.f32.partialorder %v54, inf
    %v65 = vsel %vm64, %v54, %v63
    %vm66 = vcmp.eq.f32.partialorder %v54, 0.0
    %v67 = vand.u32 %v54, 2147483648
    %v68 = vsel %vm66, %v67, %v65
    %v69 = vrcp.pop %v61
    %v70 = vmul.f32 1.0, %v69
    %v71 = vrcp.pop %v68
    %v72 = vmul.f32 1.0, %v71
    %v73 = vmul.f32 %v41, %v70
    %v74 = vmul.f32 %v42, %v72
    %v75 = vld [vmem:[%s1] sm:$0x1]
    %v77 = vlaneseq
    %v78 = vshrl.u32 %v77, 7
    %v79 = vsub.s32 0, %v78
    %v80 = vrot.slane %v75, %v79
    %v82 = vmul.f32 %v73, %v80
    %v83 = vmul.f32 %v74, %v80
    %v84 = vld [vmem:[%s2] sm:$0x1]
    %v86 = vlaneseq
    %v87 = vshrl.u32 %v86, 7
    %v88 = vsub.s32 0, %v87
    %v89 = vrot.slane %v84, %v88
    %v91 = vadd.f32 %v82, %v89
    %v92 = vadd.f32 %v83, %v89
    %93 = vst.msk [vmem:[#allocation5] sm:$0xff] %vm31, %v91
    %94 = vst.msk [vmem:[#allocation5 + $0x8] sm:$0xff] %vm31, %v92
    // Predicated region
    $region18: #{tpu_custom_call.1} parent=1 // pred_check
      _
    $region19: #{tpu_custom_call.1} parent=1 // pred_check_branch
      %96 = sbr.rel (0) target = $region21
    $region20: #{tpu_custom_call.1} parent=1 // pred_region
      %s98 = ssub.s32 256, 256
      %99 = vsyncadd [#allocation4], %s98
      %s100 = sshll.u32 [#allocation5], 4
      %s101 = int_to_ptr.vmem [resolvable:$true] %s100
      %106 = dma.vmem_to_hbm [thread:$0]  %s101, 256, %s3, [#allocation4], 128, 128, 8
    $region21: #{tpu_custom_call.1} parent=1 // pred_fallthru
      _
    // Predicated region
    $region22: #{tpu_custom_call.1} parent=1 // pred_check
      _
    $region23: #{tpu_custom_call.1} parent=1 // pred_check_branch
      %108 = sbr.rel (0) target = $region25
    $region24: #{tpu_custom_call.1} parent=1 // pred_region
      %109 = dma.done [#allocation4], 256
    $region25: #{tpu_custom_call.1} parent=1 // pred_fallthru
      _
    %110 = vsyncpa [#allocation3], 1
    %111 = vsyncpa [#allocation4], 1

</llo_original>
